<compile_context>
chip_gen: v7x
topology: tpu7x:2x2x1
jax: 0.10.0
libtpu: 0.0.40
codegen_flags: <defaults>
</compile_context>

<pallas_src>
import functools

import jax
import jax.numpy as jnp
from jax import lax
from jax.experimental import pallas as pl
from jax.experimental.pallas import tpu as pltpu

_LANE = 128
_SUBLANE = 8
_NEG_BIG = -1e30  # padded-logit bias; exp(-1e30 - m) underflows to exactly 0 in f32


def _round_up(n, m):
    return ((n + m - 1) // m) * m


def _pick_batch_tile(batch):
    """Batch-tile rows: big tiles to amortize ~0.35us/step; >=2 steps for v7x's 2 TCs."""
    if batch <= 256:
        return batch                      # single tile; block == full array dim is legal
    half = _round_up(-(-batch // 2), _SUBLANE)
    return min(512, half)                 # multiple of 8, capped at 512 rows


def _linear_softmax_kernel(x_ref, w_ref, b_ref, o_ref):
    # x: (TB, D_in)   w: (D_in, D_pad)   b: (1, D_pad)   o: (TB, D_pad)
    logits = jnp.dot(x_ref[...], w_ref[...], preferred_element_type=jnp.float32)
    logits = logits + b_ref[...]                       # padded lanes -> -1e30

    # Numerically stable softmax over the last (lane) axis.  Rows are independent,
    # so garbage rows in a partial final batch tile are harmless (their store is
    # masked by the pipeline) — do NOT add cross-row reductions here.
    m = jnp.max(logits, axis=-1, keepdims=True)
    e = jnp.exp(logits - m)                            # padded lanes -> exactly 0
    s = jnp.sum(e, axis=-1, keepdims=True)
    o_ref[...] = (e / s).astype(o_ref.dtype)           # exact divide (EUP); rows sum to 1


def init_params(weight, bias, compute_dtype=jnp.float32):
    """Pad/transpose the PyTorch Linear params ONCE (module init), not per forward.

    weight: (D_out, D_in) PyTorch nn.Linear layout.  bias: (D_out,).
    Returns (w_t, b_row, d_out) with w_t: (D_in, D_pad) in compute_dtype and
    b_row: (1, D_pad) float32 (-1e30 in padded columns).
    """
    d_out, d_in = weight.shape
    d_pad = _round_up(max(d_out, 1), _LANE)
    w_p = jnp.zeros((d_pad, d_in), jnp.float32).at[:d_out, :].set(weight.astype(jnp.float32))
    w_t = w_p.T.astype(compute_dtype)                  # one-time transpose, amortized
    b_row = jnp.full((1, d_pad), _NEG_BIG, jnp.float32).at[0, :d_out].set(
        bias.astype(jnp.float32))
    return w_t, b_row, d_out


@functools.partial(jax.jit, static_argnames=("d_out",))
def net_forward(x, w_t, b_row, d_out):
    """Pallas equivalent of Net.forward: softmax(x @ W.T + b, axis=-1)."""
    B, d_in = x.shape
    d_in_w, d_pad = w_t.shape
    assert d_in == d_in_w, "input feature dim must match weight"
    x = x.astype(w_t.dtype)                            # bf16 path if requested (fuses under jit)

    TB = _pick_batch_tile(B)
    grid_b = -(-B // TB)

    # Scoped-VMEM budget: double-buffered x/out tiles + resident weight & bias, with
    # headroom; capped at v7x's 64 MiB physical VMEM.
    elt = jnp.dtype(w_t.dtype).itemsize
    x_tile = TB * d_in * elt
    o_tile = TB * d_pad * 4
    wb_bytes = d_in * d_pad * elt + d_pad * 4
    vmem_needed = 2 * (x_tile + o_tile) + 2 * wb_bytes
    vmem_limit = int(min(max(2 * vmem_needed, 4 << 20), 64 << 20))
    # TODO(synk): if d_pad * d_in grows so the resident weight + tiles near 64 MiB (v7x),
    # add a second grid axis over d_out with a two-pass softmax instead of this layout.

    cost = pl.CostEstimate(
        flops=2 * B * d_in * d_pad,
        transcendentals=B * d_pad,
        bytes_accessed=elt * (B * d_in + d_in * d_pad) + 4 * (d_pad + B * d_pad),
    )

    out = pl.pallas_call(
        _linear_softmax_kernel,
        out_shape=jax.ShapeDtypeStruct((B, d_pad), jnp.float32),
        grid=(grid_b,),
        in_specs=[
            pl.BlockSpec((TB, d_in), lambda i: (i, 0)),      # x: streams over batch
            pl.BlockSpec((d_in, d_pad), lambda i: (0, 0)),   # weight: VMEM-resident
            pl.BlockSpec((1, d_pad), lambda i: (0, 0)),      # bias:   VMEM-resident
        ],
        out_specs=pl.BlockSpec((TB, d_pad), lambda i: (i, 0)),
        compiler_params=pltpu.CompilerParams(
            dimension_semantics=("parallel",),               # batch splits over v7x's 2 TCs
            vmem_limit_bytes=vmem_limit,
        ),
        cost_estimate=cost,
    )(x, w_t, b_row)

    # Slice away the lane padding.  (For d_out << 128 with very large B, consider a
    # masked-store (B, d_out) output instead, or fuse this slice into the consumer.)
    return out[:, :d_out] if d_pad != d_out else out


if __name__ == "__main__":
    # Small shapes consistent with Net(input_dims=(D_in,), output_dims=(D_out,))
    B, D_in, D_out = 16, 32, 8

    key = jax.random.PRNGKey(0)
    kx, kw, kb = jax.random.split(key, 3)

    x = jax.random.normal(kx, (B, D_in), dtype=jnp.float32)
    weight = jax.random.normal(kw, (D_out, D_in), dtype=jnp.float32) * 0.1
    bias = jax.random.normal(kb, (D_out,), dtype=jnp.float32) * 0.1

    # Params are padded/transposed ONCE here (module init), not inside the forward path.
    w_t, b_row, d_out = init_params(weight, bias)

    y = net_forward(x, w_t, b_row, d_out=d_out)
    y = jax.block_until_ready(y)

    # Reference check against plain JAX (high-precision matmul reference).
    ref = jax.nn.softmax(
        jnp.dot(x, weight.T, precision=lax.Precision.HIGHEST) + bias, axis=-1)
    assert y.shape == (B, D_out)
    err = float(jnp.max(jnp.abs(y - ref)))
    assert bool(jnp.allclose(y, ref, atol=2e-3, rtol=2e-3)), f"max abs err {err}"
    assert bool(jnp.allclose(jnp.sum(y, axis=-1), 1.0, atol=1e-5))

    print("KERNEL_OK")
</pallas_src>

<mosaic_0001>
module attributes {stable_mosaic.version = 11 : i64} {
  func.func @_linear_softmax_kernel(%arg0: i32, %arg1: memref<16x32xf32, #tpu.memory_space<vmem>>, %arg2: memref<32x128xf32, #tpu.memory_space<vmem>>, %arg3: memref<1x128xf32, #tpu.memory_space<vmem>>, %arg4: memref<16x128xf32, #tpu.memory_space<vmem>>) attributes {dimension_semantics = [#tpu.dimension_semantics<parallel>], iteration_bounds = array<i64: 1>, scalar_prefetch = 0 : i64, scratch_operands = 0 : i64, tpu.core_type = #tpu.core_type<tc>, window_params = [{transform_indices = @transform_0, window_bounds = array<i64: 16, 32>}, {pipeline_mode = #tpu.pipeline_mode<synchronous>, transform_indices = @transform_1, window_bounds = array<i64: 32, 128>}, {pipeline_mode = #tpu.pipeline_mode<synchronous>, transform_indices = @transform_2, window_bounds = array<i64: 1, 128>}, {transform_indices = @transform_3, window_bounds = array<i64: 16, 128>}]} {
    %c0 = arith.constant 0 : index
    %c0_0 = arith.constant 0 : index
    %0 = vector.load %arg1[%c0, %c0_0] : memref<16x32xf32, #tpu.memory_space<vmem>>, vector<16x32xf32>
    %c0_1 = arith.constant 0 : index
    %c0_2 = arith.constant 0 : index
    %1 = vector.load %arg2[%c0_1, %c0_2] : memref<32x128xf32, #tpu.memory_space<vmem>>, vector<32x128xf32>
    %cst = arith.constant dense<0.000000e+00> : vector<16x128xf32>
    %2 = tpu.matmul %0, %1, %cst {dimension_numbers = #tpu.dot_dimension_numbers<[1], [0], [0], [1], [0, 0, 1, 1], [], []>} : vector<16x32xf32>, vector<32x128xf32>, vector<16x128xf32> -> vector<16x128xf32>
    %c0_3 = arith.constant 0 : index
    %c0_4 = arith.constant 0 : index
    %3 = vector.load %arg3[%c0_3, %c0_4] : memref<1x128xf32, #tpu.memory_space<vmem>>, vector<1x128xf32>
    %4 = vector.broadcast %3 : vector<1x128xf32> to vector<16x128xf32>
    %5 = arith.addf %2, %4 : vector<16x128xf32>
    %cst_5 = arith.constant dense<0xFF800000> : vector<16xf32>
    %6 = vector.multi_reduction <maximumf>, %5, %cst_5 [1] : vector<16x128xf32> to vector<16xf32>
    %7 = vector.shape_cast %6 : vector<16xf32> to vector<16x1xf32>
    %8 = vector.broadcast %7 : vector<16x1xf32> to vector<16x128xf32>
    %9 = arith.subf %5, %8 : vector<16x128xf32>
    %10 = math.exp %9 : vector<16x128xf32>
    %cst_6 = arith.constant dense<0.000000e+00> : vector<16xf32>
    %11 = vector.multi_reduction <add>, %10, %cst_6 [1] : vector<16x128xf32> to vector<16xf32>
    %12 = vector.shape_cast %11 : vector<16xf32> to vector<16x1xf32>
    %13 = vector.broadcast %12 : vector<16x1xf32> to vector<16x128xf32>
    %14 = arith.divf %10, %13 : vector<16x128xf32>
    %c0_7 = arith.constant 0 : index
    %c0_8 = arith.constant 0 : index
    %15 = vector.load %arg4[%c0_7, %c0_8] : memref<16x128xf32, #tpu.memory_space<vmem>>, vector<16x128xf32>
    tpu.vector_store %arg4[%c0_7, %c0_8], %14 {strides = array<i32>} : memref<16x128xf32, #tpu.memory_space<vmem>>, vector<16x128xf32>,
    return
  }
  func.func @transform_0(%arg0: i32) -> (i32, i32) {
    %c0_i32 = arith.constant 0 : i32
    %c0_i32_0 = arith.constant 0 : i32
    return %arg0, %c0_i32 : i32, i32
  }
  func.func @transform_1(%arg0: i32) -> (i32, i32) {
    %c0_i32 = arith.constant 0 : i32
    %c0_i32_0 = arith.constant 0 : i32
    %c0_i32_1 = arith.constant 0 : i32
    return %c0_i32, %c0_i32_0 : i32, i32
  }
  func.func @transform_2(%arg0: i32) -> (i32, i32) {
    %c0_i32 = arith.constant 0 : i32
    %c0_i32_0 = arith.constant 0 : i32
    %c0_i32_1 = arith.constant 0 : i32
    return %c0_i32, %c0_i32_0 : i32, i32
  }
  func.func @transform_3(%arg0: i32) -> (i32, i32) {
    %c0_i32 = arith.constant 0 : i32
    %c0_i32_0 = arith.constant 0 : i32
    return %arg0, %c0_i32 : i32, i32
  }
}

</mosaic_0001>

<llo_original>
// kernel: net_forward.1
$region0: #{net_forward.1}
  #allocation0 [shape = 'u32[]', space=smem, size = 0x4, offset = 0x4, fixed_abs, tag = 'smem constant byte address 0x4 - core index']
  #allocation1 [shape = 'u32[144,128]{1,0:T(1,128)}', space=vmem, size = 0x12000, scoped, tag = 'internal scratch']
  %s0 = inlined_call_operand.hbm [shape: f32[16,32], index: 0, kind: input, shape index: {}]
  %s1 = inlined_call_operand.hbm [shape: f32[32,128], index: 1, kind: input, shape index: {}]
  %s2 = inlined_call_operand.vmem [shape: f32[1,128], index: 2, kind: input, shape index: {}]
  %s3 = inlined_call_operand.vmem [shape: f32[16,128], index: 3, kind: output, shape index: {}]
  %s4 = sld [smem:[#allocation0]]
  $region30: #{net_forward.1} parent=0
    _
  %s6 = ssub.s32 1, %s4
  %s7 = scalar_select 0, %s6, %s4
  $region1: #{net_forward.1} parent=0
    #allocation2 [shape = 'u8[8192]{0}', space=vmem, size = 0x2000, scoped, tag = 'input window, operand 0, single buffered']
    #allocation3 [shape = 's32[1]{0}', space=sflag, size = 0x4, scoped, tag = 'scoped memory for net_forward.1']
    #allocation4 [shape = 'u8[16384]{0}', space=vmem, size = 0x4000, scoped, tag = 'input window, operand 1, single buffered']
    #allocation5 [shape = 's32[1]{0}', space=sflag, size = 0x4, scoped, tag = 'scoped memory for net_forward.1']
    %8 = vsyncpa [#allocation3], 0
    %9 = vsyncpa [#allocation5], 0
    // Predicated region
    $region2: #{net_forward.1} parent=1 // pred_check
      _
    $region3: #{net_forward.1} parent=1 // pred_check_branch
      %11 = sbr.rel (0) target = $region5
    $region4: #{net_forward.1} parent=1 // pred_region
      %s13 = ssub.s32 256, 256
      %14 = vsyncadd [#allocation3], %s13
      %s15 = sshll.u32 [#allocation2], 4
      %s16 = int_to_ptr.vmem [resolvable:$true] %s15
      %21 = dma.hbm_to_vmem [thread:$0]  %s0, 256, %s16, [#allocation3], 128, 128, 8
    $region5: #{net_forward.1} parent=1 // pred_fallthru
      _
    // Predicated region
    $region6: #{net_forward.1} parent=1 // pred_check
      _
    $region7: #{net_forward.1} parent=1 // pred_check_branch
      %23 = sbr.rel (0) target = $region9
    $region8: #{net_forward.1} parent=1 // pred_region
      %s25 = ssub.s32 512, 512
      %26 = vsyncadd [#allocation5], %s25
      %s27 = sshll.u32 [#allocation4], 4
      %s28 = int_to_ptr.vmem [resolvable:$true] %s27
      %33 = dma.hbm_to_vmem [thread:$0]  %s1, 512, %s28, [#allocation5], 128, 128, 8
    $region9: #{net_forward.1} parent=1 // pred_fallthru
      _
    // Predicated region
    $region10: #{net_forward.1} parent=1 // pred_check
      _
    $region11: #{net_forward.1} parent=1 // pred_check_branch
      %35 = sbr.rel (0) target = $region13
    $region12: #{net_forward.1} parent=1 // pred_region
      _
    $region13: #{net_forward.1} parent=1 // pred_fallthru
      _
    // Predicated region
    $region14: #{net_forward.1} parent=1 // pred_check
      _
    $region15: #{net_forward.1} parent=1 // pred_check_branch
      %37 = sbr.rel (0) target = $region17
    $region16: #{net_forward.1} parent=1 // pred_region
      %38 = dma.done [#allocation3], 256
    $region17: #{net_forward.1} parent=1 // pred_fallthru
      _
    // Predicated region
    $region18: #{net_forward.1} parent=1 // pred_check
      _
    $region19: #{net_forward.1} parent=1 // pred_check_branch
      %40 = sbr.rel (0) target = $region21
    $region20: #{net_forward.1} parent=1 // pred_region
      %41 = dma.done [#allocation5], 512
    $region21: #{net_forward.1} parent=1 // pred_fallthru
      _
    %v42 = vld [vmem:[#allocation2] sm:$0xff]
    %v43 = vld [vmem:[#allocation2 + $0x8] sm:$0xff]
    %v44 = vld [vmem:[#allocation4] sm:$0xff]
    %v45 = vld [vmem:[#allocation4 + $0x8] sm:$0xff]
    %v46 = vld [vmem:[#allocation4 + $0x10] sm:$0xff]
    %v47 = vld [vmem:[#allocation4 + $0x18] sm:$0xff]
    %v48 = vld [vmem:[%s2] sm:$0x1]
    %v50 = vlaneseq
    %v51 = vshrl.u32 %v50, 7
    %v52 = vsub.s32 0, %v51
    %v53 = vrot.slane %v48, %v52
    %vm55 = vcmask 261120
    %v57 = vsel %vm55, %v42, 0
    %v60 = vsel %vm55, %v43, 0
    %62 = vmatprep.subr.mxu0 0.0
    %63 = vmatpush1.msra.mxu0 %v44
    %64 = vmatprep.subr.mxu0 0.0
    %65 = vmatpush1.msra.mxu0 %v45
    %66 = vmatprep.subr.mxu0 0.0
    %67 = vmatpush1.msra.mxu0 %v46
    %68 = vmatprep.subr.mxu0 0.0
    %69 = vmatpush1.msra.mxu0 %v47
    %70 = vmatprep.subr.mxu0 0.0
    %71 = vmatpush1.msra.mxu0 0.0
    %72 = vmatprep.subr.mxu0 0.0
    %73 = vmatpush1.msra.mxu0 0.0
    %74 = vmatprep.subr.mxu0 0.0
    %75 = vmatpush1.msra.mxu0 0.0
    %76 = vmatprep.subr.mxu0 0.0
    %77 = vmatpush1.msra.mxu0 0.0
    %78 = vmatprep.subr.mxu0 0.0
    %79 = vmatpush1.msra.mxu0 0.0
    %80 = vmatprep.subr.mxu0 0.0
    %81 = vmatpush1.msra.mxu0 0.0
    %82 = vmatprep.subr.mxu0 0.0
    %83 = vmatpush1.msra.mxu0 0.0
    %84 = vmatprep.subr.mxu0 0.0
    %85 = vmatpush1.msra.mxu0 0.0
    %86 = vmatprep.subr.mxu0 0.0
    %87 = vmatpush1.msra.mxu0 0.0
    %88 = vmatprep.subr.mxu0 0.0
    %89 = vmatpush1.msra.mxu0 0.0
    %90 = vmatprep.subr.mxu0 0.0
    %91 = vmatpush1.msra.mxu0 0.0
    %92 = vmatprep.subr.mxu0 0.0
    %93 = vmatpush1.msra.mxu0 0.0
    %94 = vmatprep.subr.mxu0 0.0
    %95 = vmatpush1.msra.mxu0 0.0
    %96 = vmatprep.subr.mxu0 0.0
    %97 = vmatpush1.msra.mxu0 0.0
    %98 = vmatprep.subr.mxu0 0.0
    %99 = vmatpush1.msra.mxu0 0.0
    %100 = vmatprep.subr.mxu0 0.0
    %101 = vmatpush1.msra.mxu0 0.0
    %102 = vmatprep.subr.mxu0 0.0
    %103 = vmatpush1.msra.mxu0 0.0
    %104 = vmatprep.subr.mxu0 0.0
    %105 = vmatpush1.msra.mxu0 0.0
    %106 = vmatprep.subr.mxu0 0.0
    %107 = vmatpush1.msra.mxu0 0.0
    %108 = vmatprep.subr.mxu0 0.0
    %109 = vmatpush1.msra.mxu0 0.0
    %110 = vmatprep.subr.mxu0 0.0
    %111 = vmatpush1.msra.mxu0 0.0
    %112 = vmatprep.subr.mxu0 0.0
    %113 = vmatpush1.msra.mxu0 0.0
    %114 = vmatprep.subr.mxu0 0.0
    %115 = vmatpush1.msra.mxu0 0.0
    %116 = vmatprep.subr.mxu0 0.0
    %117 = vmatpush1.msra.mxu0 0.0
    %118 = vmatprep.subr.mxu0 0.0
    %119 = vmatpush1.msra.mxu0 0.0
    %120 = vmatprep.subr.mxu0 0.0
    %121 = vmatpush1.msra.mxu0 0.0
    %122 = vmatprep.subr.mxu0 0.0
    %123 = vmatpush1.msra.mxu0 0.0
    %124 = vmatprep.subr.mxu0 0.0
    %125 = vmatpush1.msra.mxu0 0.0
    %126 = vmatprep.mubr.f32.mxu0 0.0
    %127 = vmatmul.mubr.f32.gmra.mrb[0].mxu0 %v57
    %v128 = vpop.f32.mrb[0].mxu0
    %v129 = vadd.f32 %v53, %v128
    %v130 = vpop.f32.mrb[0].mxu0
    %131 = vmatprep.mubr.f32.mxu0 0.0
    %132 = vmatmul.mubr.f32.gmra.mrb[0].mxu0 %v60
    %v133 = vpop.f32.mrb[0].mxu0
    %v134 = vadd.f32 %v53, %v133
    %v135 = vpop.f32.mrb[0].mxu0
    %136 = vdwg.mxu0
    %137 = vmax.xlane.f32.xlu0 %v129
    %v138 = vpop.xlane.xlu0 %137
    %139 = vmax.xlane.f32.xlu0 %v134
    %v140 = vpop.xlane.xlu0 %139
    %v141 = vsub.f32 %v129, %v138
    %v142 = vsub.f32 %v134, %v140
    %v143 = vmul.f32 %v141, 1.442695
    %v144 = vpow.pop %v143
    %v145 = vmul.f32 %v142, 1.442695
    %v146 = vpow.pop %v145
    %147 = vadd.xlane.f32.xlu0 %v144
    %v148 = vpop.xlane.xlu0 %147
    %149 = vadd.xlane.f32.xlu0 %v146
    %v150 = vpop.xlane.xlu0 %149
    %v151 = vrcp.pop %v148
    %v152 = vmul.f32 %v144, %v151
    %v153 = vrcp.pop %v150
    %v154 = vmul.f32 %v146, %v153
    %155 = vst [vmem:[%s3] sm:$0xff] %v152
    %156 = vst [vmem:[%s3 + $0x8] sm:$0xff] %v154
    // Predicated region
    $region22: #{net_forward.1} parent=1 // pred_check
      _
    $region23: #{net_forward.1} parent=1 // pred_check_branch
      %158 = sbr.rel (0) target = $region25
    $region24: #{net_forward.1} parent=1 // pred_region
      _
    $region25: #{net_forward.1} parent=1 // pred_fallthru
      _
    // Predicated region
    $region26: #{net_forward.1} parent=1 // pred_check
      _
    $region27: #{net_forward.1} parent=1 // pred_check_branch
      %160 = sbr.rel (0) target = $region29
    $region28: #{net_forward.1} parent=1 // pred_region
      _
    $region29: #{net_forward.1} parent=1 // pred_fallthru
      _
    %161 = vsyncpa [#allocation3], 1
    %162 = vsyncpa [#allocation5], 1

</llo_original>
